<compile_context>
chip_gen: v7x
topology: tpu7x:2x2x1
jax: 0.10.0
libtpu: 0.0.40
codegen_flags: <defaults>
</compile_context>

<pallas_src>
import jax
import jax.numpy as jnp
from jax import lax
from jax.experimental import pallas as pl
from jax.experimental.pallas import tpu as pltpu


# ----------------------------------------------------------------------------
# Pallas kernel
# ----------------------------------------------------------------------------
def _make_kernel(degree: int, hw_true: int, hw_tile: int, eps: float = 1e-5):
    """Per-(group, sample, hw-tile) kernel body."""
    assert degree >= 1
    f32 = jnp.float32
    bf16 = jnp.bfloat16
    inv_hw = 1.0 / float(hw_true)

    def kernel(ab_ref, px_ref, msk_ref, bias_ref, w_ref, o_ref):
        gi = pl.program_id(0)
        ti = pl.program_id(2)

        # per-group min-max normalization scalars (SMEM): x_norm = a*x + b
        a = ab_ref[2 * gi]
        b = ab_ref[2 * gi + 1]

        px = px_ref[...]                        # (CKK, T) bf16 patches of raw (padded) x
        msk = msk_ref[...].astype(f32)          # (CKK, T) 1.0 inside image, 0.0 at padding
        xn = a * px.astype(f32) + b             # normalized x (padded slots are masked below)

        # acc = hoisted P0 contribution (precomputed bias) + base conv
        acc = bias_ref[...] + jnp.dot(w_ref[0], px, preferred_element_type=f32)

        # Legendre recurrence with the mask carried through (recurrence is linear in
        # P_prev/P_cur, so the {0,1} mask factor propagates; no per-degree re-masking).
        p_prev = msk                            # P0 * mask
        p_cur = xn * msk                        # P1 * mask
        acc = acc + jnp.dot(w_ref[1], p_cur.astype(bf16), preferred_element_type=f32)
        for m in range(1, degree):
            c1 = (2.0 * m + 1.0) / (m + 1.0)    # precomputed constants: no per-tile divide
            c2 = float(m) / (m + 1.0)
            p_next = c1 * (xn * p_cur) - c2 * p_prev
            acc = acc + jnp.dot(w_ref[m + 1], p_next.astype(bf16),
                                preferred_element_type=f32)
            p_prev, p_cur = p_cur, p_next

        start = pl.multiple_of(ti * hw_tile, 128)
        o_ref[:, pl.ds(start, hw_tile)] = acc   # raw conv sum; normalized on last tile

        # InstanceNorm2d (affine=False, eps=1e-5) + SiLU once the full HW extent is
        # resident in the output block (index map is constant over the HW-tile axis).
        @pl.when(ti == pl.num_programs(2) - 1)
        def _():
            y = o_ref[...]                                      # (gout, HWP) f32
            mean = jnp.sum(y, axis=-1, keepdims=True) * inv_hw
            lane = lax.broadcasted_iota(jnp.int32, y.shape, 1)
            dev = jnp.where(lane < hw_true, y - mean, 0.0)      # exclude lane padding
            var = jnp.sum(dev * dev, axis=-1, keepdims=True) * inv_hw
            yhat = (y - mean) * lax.rsqrt(var + eps)
            o_ref[...] = yhat * jax.nn.sigmoid(yhat)            # SiLU

    return kernel


# ----------------------------------------------------------------------------
# JAX glue
# ----------------------------------------------------------------------------
def _im2col_cf(x, k, stride, padding, dilation):
    """x: (B, C, H, W) -> (B, C*k*k, Hout*Wout); feature axis ordered (c, kh, kw)."""
    b, c, h, w = x.shape
    xp = jnp.pad(x, ((0, 0), (0, 0), (padding, padding), (padding, padding)))
    hp, wp = h + 2 * padding, w + 2 * padding
    hout = (hp - dilation * (k - 1) - 1) // stride + 1
    wout = (wp - dilation * (k - 1) - 1) // stride + 1
    cols = []
    for kh in range(k):
        for kw in range(k):
            sl = xp[:, :,
                    kh * dilation: kh * dilation + stride * (hout - 1) + 1: stride,
                    kw * dilation: kw * dilation + stride * (wout - 1) + 1: stride]
            cols.append(sl)                          # (B, C, Hout, Wout)
    p = jnp.stack(cols, axis=2)                      # (B, C, k*k, Hout, Wout)
    return p.reshape(b, c * k * k, hout * wout), hout, wout


class LegendreKANConv2DPallas:
    """Pallas port of LegendreKANConvNDLayer with ndim=2 (Conv2d / InstanceNorm2d)."""

    def __init__(self, input_dim, output_dim, degree, kernel_size,
                 groups=1, padding=0, stride=1, dilation=1, key=None):
        assert input_dim % groups == 0 and output_dim % groups == 0
        assert degree >= 1  # degree == 0 torch path (unsqueeze(-1)) is degenerate
        self.input_dim, self.output_dim = input_dim, output_dim
        self.degree, self.kernel_size = degree, kernel_size
        self.groups, self.padding = groups, padding
        self.stride, self.dilation = stride, dilation
        self.gin = input_dim // groups
        self.gout = output_dim // groups
        # TODO(synk): DropoutNd is inference-disabled here (dropout=0.0 path).

        k1, k2 = jax.random.split(key)
        # kaiming_uniform_(nonlinearity='linear') -> U(-b, b) with b = sqrt(3 / fan_in)
        fan_base = self.gin * kernel_size * kernel_size
        b_base = (3.0 / fan_base) ** 0.5
        self.base_w = jax.random.uniform(
            k1, (groups, self.gout, self.gin, kernel_size, kernel_size),
            jnp.float32, -b_base, b_base)
        fan_poly = self.gout * self.gin * (degree + 1) * kernel_size * kernel_size
        b_poly = (3.0 / fan_poly) ** 0.5
        self.poly_w = jax.random.uniform(
            k2, (groups, self.gout, self.gin * (degree + 1), kernel_size, kernel_size),
            jnp.float32, -b_poly, b_poly)

    def __call__(self, x):
        n, c, h, w = x.shape
        g, gin, gout = self.groups, self.gin, self.gout
        k, d = self.kernel_size, self.degree

        # split into groups: (G, N, gin, H, W)
        xg = jnp.transpose(x.reshape(n, g, gin, h, w), (1, 0, 2, 3, 4))

        # per-group min-max normalization constants (x_norm = a*x + b); matches the
        # torch layer exactly (including its NaN hazard when a group's input is constant).
        mn = jnp.min(xg, axis=(1, 2, 3, 4))
        mx = jnp.max(xg, axis=(1, 2, 3, 4))
        a = 2.0 / (mx - mn)
        b = -2.0 * mn / (mx - mn) - 1.0
        ab = jnp.stack([a, b], axis=-1).reshape(-1).astype(jnp.float32)  # (2G,) -> SMEM

        # im2col patches of raw (spatially zero-padded) x: features on sublanes,
        # spatial positions on the lane axis.
        px, hout, wout = _im2col_cf(xg.reshape(g * n, gin, h, w),
                                    k, self.stride, self.padding, self.dilation)
        hw = hout * wout
        ckk = gin * k * k

        # pad HW (lane axis) up to a multiple of the HW tile (itself a multiple of 128)
        hw128 = -(-hw // 128) * 128
        hw_tile = min(512, hw128)
        hwp = -(-hw // hw_tile) * hw_tile
        n_t = hwp // hw_tile

        px = jnp.pad(px, ((0, 0), (0, 0), (0, hwp - hw)))
        patches = px.reshape(g, n, ckk, hwp).astype(jnp.bfloat16)

        # validity mask: 1.0 where a patch element comes from inside the image
        msk, _, _ = _im2col_cf(jnp.ones((1, gin, h, w), jnp.float32),
                               k, self.stride, self.padding, self.dilation)
        msk = jnp.pad(msk[0], ((0, 0), (0, hwp - hw)))               # (CKK, HWP) f32

        # weights: (G, degree+1, gout, CKK); slot 0 = base conv, slot m = P_m conv.
        wb = self.base_w.reshape(g, 1, gout, ckk)
        wp = self.poly_w.reshape(g, gout, d + 1, gin, k, k)
        wp = jnp.transpose(wp, (0, 2, 1, 3, 4, 5)).reshape(g, d + 1, gout, ckk)
        w_p0 = wp[:, 0]                                              # (G, gout, CKK) f32
        wcomb = jnp.concatenate([wb, wp[:, 1:]], axis=1).astype(jnp.bfloat16)

        # hoisted, sample-invariant P0 contribution: bias[g] = W_P0[g] @ mask
        bias = jnp.einsum('goc,ch->goh', w_p0, msk).astype(jnp.float32)  # (G, gout, HWP)

        msk_b16 = msk.astype(jnp.bfloat16)   # exact for {0,1}; halves mask DMA

        kernel = _make_kernel(d, hw_true=hw, hw_tile=hw_tile)

        # VMEM budget: double-buffered per-tile inputs + resident weights/output +
        # recurrence temporaries; clamped so the limit is valid on v5e/v6e/v7x.
        per_tile = ckk * hw_tile * (2 + 2) + gout * hw_tile * 4
        resident = (d + 1) * max(gout, 8) * max(ckk, 128) * 2 + max(gout, 8) * hwp * 4
        temps = 8 * ckk * hw_tile * 4
        vmem_limit = int(min(max(2 * (2 * per_tile + resident + temps), 32 * 2**20),
                             48 * 2**20))

        out = pl.pallas_call(
            kernel,
            out_shape=jax.ShapeDtypeStruct((g, n, gout, hwp), jnp.float32),
            grid=(g, n, n_t),
            in_specs=[
                pl.BlockSpec(memory_space=pltpu.MemorySpace.SMEM),      # a,b scalars
                pl.BlockSpec((None, None, ckk, hw_tile),
                             lambda gi, ni, ti: (gi, ni, 0, ti)),       # patches
                pl.BlockSpec((ckk, hw_tile),
                             lambda gi, ni, ti: (0, ti)),               # mask
                pl.BlockSpec((None, gout, hw_tile),
                             lambda gi, ni, ti: (gi, 0, ti)),           # P0 bias
                pl.BlockSpec((None, d + 1, gout, ckk),
                             lambda gi, ni, ti: (gi, 0, 0, 0)),         # weights
            ],
            out_specs=pl.BlockSpec((None, None, gout, hwp),
                                   lambda gi, ni, ti: (gi, ni, 0, 0)),  # resident over ti
            compiler_params=pltpu.CompilerParams(
                dimension_semantics=("parallel", "parallel", "arbitrary"),
                vmem_limit_bytes=vmem_limit),
        )(ab, patches, msk_b16, bias, wcomb)

        # (G, N, gout, HWP) -> (N, G*gout, Hout, Wout); groups concatenated on channels
        y = out[..., :hw]
        y = jnp.transpose(y, (1, 0, 2, 3)).reshape(n, g * gout, hout, wout)
        return y


# ----------------------------------------------------------------------------
# Pure-JAX reference (mirrors the PyTorch forward exactly) for validation
# ----------------------------------------------------------------------------
def reference_forward(x, base_w, poly_w, degree, groups, k, stride, padding,
                      dilation, eps=1e-5):
    n, c, h, w = x.shape
    gin = c // groups
    outs = []
    for g in range(groups):
        xg = x[:, g * gin:(g + 1) * gin]
        dn = lax.conv_dimension_numbers(xg.shape, base_w[g].shape,
                                        ('NCHW', 'OIHW', 'NCHW'))
        base = lax.conv_general_dilated(
            xg, base_w[g], (stride, stride),
            [(padding, padding), (padding, padding)],
            rhs_dilation=(dilation, dilation), dimension_numbers=dn)
        mn, mx = xg.min(), xg.max()
        xn = 2.0 * (xg - mn) / (mx - mn) - 1.0
        polys = [jnp.ones_like(xn), xn]
        for m in range(1, degree):
            polys.append(((2.0 * m + 1.0) * xn * polys[-1] - m * polys[-2]) / (m + 1.0))
        basis = jnp.concatenate(polys[:degree + 1], axis=1)
        dn2 = lax.conv_dimension_numbers(basis.shape, poly_w[g].shape,
                                         ('NCHW', 'OIHW', 'NCHW'))
        poly = lax.conv_general_dilated(
            basis, poly_w[g], (stride, stride),
            [(padding, padding), (padding, padding)],
            rhs_dilation=(dilation, dilation), dimension_numbers=dn2)
        y = base + poly
        mean = y.mean(axis=(2, 3), keepdims=True)
        var = ((y - mean) ** 2).mean(axis=(2, 3), keepdims=True)
        y = (y - mean) * lax.rsqrt(var + eps)
        outs.append(y * jax.nn.sigmoid(y))
    return jnp.concatenate(outs, axis=1)


# ----------------------------------------------------------------------------
if __name__ == "__main__":
    key = jax.random.PRNGKey(0)
    k_x, k_w = jax.random.split(key)

    N, C_IN, C_OUT, H, W = 2, 4, 8, 16, 16
    DEGREE, KSIZE, GROUPS, PAD, STRIDE, DIL = 3, 3, 2, 1, 1, 1

    x = jax.random.normal(k_x, (N, C_IN, H, W), dtype=jnp.float32)

    layer = LegendreKANConv2DPallas(C_IN, C_OUT, DEGREE, KSIZE,
                                    groups=GROUPS, padding=PAD, stride=STRIDE,
                                    dilation=DIL, key=k_w)

    fwd = jax.jit(lambda inp: layer(inp))
    y = jax.block_until_ready(fwd(x))

    y_ref = jax.block_until_ready(
        reference_forward(x, layer.base_w, layer.poly_w, DEGREE, GROUPS,
                          KSIZE, STRIDE, PAD, DIL))

    assert y.shape == (N, C_OUT, H, W), y.shape
    max_err = float(jnp.max(jnp.abs(y - y_ref)))
    assert max_err < 5e-2, f"max abs error vs reference: {max_err}"

    print("KERNEL_OK")
</pallas_src>

<mosaic_0001>
module attributes {stable_mosaic.version = 11 : i64} {
  func.func @kernel(%arg0: i32, %arg1: i32, %arg2: i32, %arg3: memref<4xf32, #tpu.memory_space<smem>>, %arg4: memref<1x1x18x256xbf16, #tpu.memory_space<vmem>>, %arg5: memref<18x256xbf16, #tpu.memory_space<vmem>>, %arg6: memref<1x4x256xf32, #tpu.memory_space<vmem>>, %arg7: memref<1x4x4x18xbf16, #tpu.memory_space<vmem>>, %arg8: memref<1x1x4x256xf32, #tpu.memory_space<vmem>>) attributes {dimension_semantics = [#tpu.dimension_semantics<parallel>, #tpu.dimension_semantics<parallel>, #tpu.dimension_semantics<arbitrary>], iteration_bounds = array<i64: 2, 2, 1>, scalar_prefetch = 0 : i64, scratch_operands = 0 : i64, tpu.core_type = #tpu.core_type<tc>, window_params = [{transform_indices = @transform_0, window_bounds = array<i64: 4>}, {transform_indices = @transform_1, window_bounds = array<i64: 1, 1, 18, 256>}, {transform_indices = @transform_2, window_bounds = array<i64: 18, 256>}, {transform_indices = @transform_3, window_bounds = array<i64: 1, 4, 256>}, {transform_indices = @transform_4, window_bounds = array<i64: 1, 4, 4, 18>}, {transform_indices = @transform_5, window_bounds = array<i64: 1, 1, 4, 256>}]} {
    %c2_i32 = arith.constant 2 : i32
    %0 = arith.muli %c2_i32, %arg0 : i32
    %1 = arith.index_cast %0 : i32 to index
    %2 = memref.load %arg3[%1] : memref<4xf32, #tpu.memory_space<smem>>
    %c2_i32_0 = arith.constant 2 : i32
    %3 = arith.muli %c2_i32_0, %arg0 : i32
    %c1_i32 = arith.constant 1 : i32
    %4 = arith.addi %3, %c1_i32 : i32
    %5 = arith.index_cast %4 : i32 to index
    %6 = memref.load %arg3[%5] : memref<4xf32, #tpu.memory_space<smem>>
    %c0 = arith.constant 0 : index
    %c0_1 = arith.constant 0 : index
    %c0_2 = arith.constant 0 : index
    %c0_3 = arith.constant 0 : index
    %7 = vector.load %arg4[%c0, %c0_1, %c0_2, %c0_3] : memref<1x1x18x256xbf16, #tpu.memory_space<vmem>>, vector<1x1x18x256xbf16>
    %8 = vector.shape_cast %7 : vector<1x1x18x256xbf16> to vector<18x256xbf16>
    %c0_4 = arith.constant 0 : index
    %c0_5 = arith.constant 0 : index
    %9 = vector.load %arg5[%c0_4, %c0_5] : memref<18x256xbf16, #tpu.memory_space<vmem>>, vector<18x256xbf16>
    %10 = arith.extf %9 : vector<18x256xbf16> to vector<18x256xf32>
    %11 = arith.extf %8 : vector<18x256xbf16> to vector<18x256xf32>
    %12 = vector.broadcast %2 : f32 to vector<18x256xf32>
    %13 = arith.mulf %12, %11 : vector<18x256xf32>
    %14 = vector.broadcast %6 : f32 to vector<18x256xf32>
    %15 = arith.addf %13, %14 : vector<18x256xf32>
    %c0_6 = arith.constant 0 : index
    %c0_7 = arith.constant 0 : index
    %c0_8 = arith.constant 0 : index
    %16 = vector.load %arg6[%c0_6, %c0_7, %c0_8] : memref<1x4x256xf32, #tpu.memory_space<vmem>>, vector<1x4x256xf32>
    %17 = vector.shape_cast %16 : vector<1x4x256xf32> to vector<4x256xf32>
    %c0_9 = arith.constant 0 : index
    %c0_10 = arith.constant 0 : index
    %c0_11 = arith.constant 0 : index
    %c0_12 = arith.constant 0 : index
    %18 = vector.load %arg7[%c0_9, %c0_10, %c0_11, %c0_12] : memref<1x4x4x18xbf16, #tpu.memory_space<vmem>>, vector<1x1x4x18xbf16>
    %19 = vector.shape_cast %18 : vector<1x1x4x18xbf16> to vector<4x18xbf16>
    %cst = arith.constant dense<0.000000e+00> : vector<4x256xf32>
    %20 = tpu.matmul %19, %8, %cst {dimension_numbers = #tpu.dot_dimension_numbers<[1], [0], [0], [1], [0, 0, 1, 1], [], []>} : vector<4x18xbf16>, vector<18x256xbf16>, vector<4x256xf32> -> vector<4x256xf32>
    %21 = arith.addf %17, %20 : vector<4x256xf32>
    %22 = arith.mulf %15, %10 : vector<18x256xf32>
    %c0_13 = arith.constant 0 : index
    %c1 = arith.constant 1 : index
    %c0_14 = arith.constant 0 : index
    %c0_15 = arith.constant 0 : index
    %23 = vector.load %arg7[%c0_13, %c1, %c0_14, %c0_15] : memref<1x4x4x18xbf16, #tpu.memory_space<vmem>>, vector<1x1x4x18xbf16>
    %24 = vector.shape_cast %23 : vector<1x1x4x18xbf16> to vector<4x18xbf16>
    %25 = arith.truncf %22 : vector<18x256xf32> to vector<18x256xbf16>
    %cst_16 = arith.constant dense<0.000000e+00> : vector<4x256xf32>
    %26 = tpu.matmul %24, %25, %cst_16 {dimension_numbers = #tpu.dot_dimension_numbers<[1], [0], [0], [1], [0, 0, 1, 1], [], []>} : vector<4x18xbf16>, vector<18x256xbf16>, vector<4x256xf32> -> vector<4x256xf32>
    %27 = arith.addf %21, %26 : vector<4x256xf32>
    %28 = arith.mulf %15, %22 : vector<18x256xf32>
    %cst_17 = arith.constant 1.500000e+00 : f32
    %29 = vector.broadcast %cst_17 : f32 to vector<18x256xf32>
    %30 = arith.mulf %29, %28 : vector<18x256xf32>
    %cst_18 = arith.constant 5.000000e-01 : f32
    %31 = vector.broadcast %cst_18 : f32 to vector<18x256xf32>
    %32 = arith.mulf %31, %10 : vector<18x256xf32>
    %33 = arith.subf %30, %32 : vector<18x256xf32>
    %c0_19 = arith.constant 0 : index
    %c2 = arith.constant 2 : index
    %c0_20 = arith.constant 0 : index
    %c0_21 = arith.constant 0 : index
    %34 = vector.load %arg7[%c0_19, %c2, %c0_20, %c0_21] : memref<1x4x4x18xbf16, #tpu.memory_space<vmem>>, vector<1x1x4x18xbf16>
    %35 = vector.shape_cast %34 : vector<1x1x4x18xbf16> to vector<4x18xbf16>
    %36 = arith.truncf %33 : vector<18x256xf32> to vector<18x256xbf16>
    %cst_22 = arith.constant dense<0.000000e+00> : vector<4x256xf32>
    %37 = tpu.matmul %35, %36, %cst_22 {dimension_numbers = #tpu.dot_dimension_numbers<[1], [0], [0], [1], [0, 0, 1, 1], [], []>} : vector<4x18xbf16>, vector<18x256xbf16>, vector<4x256xf32> -> vector<4x256xf32>
    %38 = arith.addf %27, %37 : vector<4x256xf32>
    %39 = arith.mulf %15, %33 : vector<18x256xf32>
    %cst_23 = arith.constant 1.66666663 : f32
    %40 = vector.broadcast %cst_23 : f32 to vector<18x256xf32>
    %41 = arith.mulf %40, %39 : vector<18x256xf32>
    %cst_24 = arith.constant 0.666666686 : f32
    %42 = vector.broadcast %cst_24 : f32 to vector<18x256xf32>
    %43 = arith.mulf %42, %22 : vector<18x256xf32>
    %44 = arith.subf %41, %43 : vector<18x256xf32>
    %c0_25 = arith.constant 0 : index
    %c3 = arith.constant 3 : index
    %c0_26 = arith.constant 0 : index
    %c0_27 = arith.constant 0 : index
    %45 = vector.load %arg7[%c0_25, %c3, %c0_26, %c0_27] : memref<1x4x4x18xbf16, #tpu.memory_space<vmem>>, vector<1x1x4x18xbf16>
    %46 = vector.shape_cast %45 : vector<1x1x4x18xbf16> to vector<4x18xbf16>
    %47 = arith.truncf %44 : vector<18x256xf32> to vector<18x256xbf16>
    %cst_28 = arith.constant dense<0.000000e+00> : vector<4x256xf32>
    %48 = tpu.matmul %46, %47, %cst_28 {dimension_numbers = #tpu.dot_dimension_numbers<[1], [0], [0], [1], [0, 0, 1, 1], [], []>} : vector<4x18xbf16>, vector<18x256xbf16>, vector<4x256xf32> -> vector<4x256xf32>
    %49 = arith.addf %38, %48 : vector<4x256xf32>
    %c256_i32 = arith.constant 256 : i32
    %50 = arith.muli %arg2, %c256_i32 : i32
    %51 = tpu.assume_multiple %50, 128 : i32
    %c0_29 = arith.constant 0 : index
    %c0_30 = arith.constant 0 : index
    %c0_31 = arith.constant 0 : index
    %52 = arith.index_cast %51 : i32 to index
    %53 = vector.load %arg8[%c0_29, %c0_30, %c0_31, %52] : memref<1x1x4x256xf32, #tpu.memory_space<vmem>>, vector<1x1x4x256xf32>
    %54 = vector.shape_cast %53 : vector<1x1x4x256xf32> to vector<4x256xf32>
    %55 = vector.shape_cast %49 : vector<4x256xf32> to vector<1x1x4x256xf32>
    tpu.vector_store %arg8[%c0_29, %c0_30, %c0_31, %52], %55 {strides = array<i32>} : memref<1x1x4x256xf32, #tpu.memory_space<vmem>>, vector<1x1x4x256xf32>,
    %c0_i32 = arith.constant 0 : i32
    %56 = arith.cmpi eq, %arg2, %c0_i32 : i32
    %57 = arith.extui %56 : i1 to i32
    %c0_i32_32 = arith.constant 0 : i32
    %58 = arith.cmpi ne, %57, %c0_i32_32 : i32
    scf.if %58 {
      %c0_33 = arith.constant 0 : index
      %c0_34 = arith.constant 0 : index
      %c0_35 = arith.constant 0 : index
      %c0_36 = arith.constant 0 : index
      %59 = vector.load %arg8[%c0_33, %c0_34, %c0_35, %c0_36] : memref<1x1x4x256xf32, #tpu.memory_space<vmem>>, vector<1x1x4x256xf32>
      %60 = vector.shape_cast %59 : vector<1x1x4x256xf32> to vector<4x256xf32>
      %cst_37 = arith.constant dense<0.000000e+00> : vector<4xf32>
      %61 = vector.multi_reduction <add>, %60, %cst_37 [1] : vector<4x256xf32> to vector<4xf32>
      %62 = vector.shape_cast %61 : vector<4xf32> to vector<4x1xf32>
      %cst_38 = arith.constant 3.906250e-03 : f32
      %63 = vector.broadcast %cst_38 : f32 to vector<4x1xf32>
      %64 = arith.mulf %62, %63 : vector<4x1xf32>
      %65 = tpu.iota {dimensions = array<i32: 1>} : vector<4x256xi32>
      %c256_i32_39 = arith.constant 256 : i32
      %66 = vector.broadcast %c256_i32_39 : i32 to vector<4x256xi32>
      %67 = arith.cmpi slt, %65, %66 : vector<4x256xi32>
      %68 = vector.broadcast %64 : vector<4x1xf32> to vector<4x256xf32>
      %69 = arith.subf %60, %68 : vector<4x256xf32>
      %cst_40 = arith.constant 0.000000e+00 : f32
      %70 = vector.broadcast %cst_40 : f32 to vector<4x256xf32>
      %71 = arith.select %67, %69, %70 : vector<4x256xi1>, vector<4x256xf32>
      %72 = arith.mulf %71, %71 : vector<4x256xf32>
      %cst_41 = arith.constant dense<0.000000e+00> : vector<4xf32>
      %73 = vector.multi_reduction <add>, %72, %cst_41 [1] : vector<4x256xf32> to vector<4xf32>
      %74 = vector.shape_cast %73 : vector<4xf32> to vector<4x1xf32>
      %cst_42 = arith.constant 3.906250e-03 : f32
      %75 = vector.broadcast %cst_42 : f32 to vector<4x1xf32>
      %76 = arith.mulf %74, %75 : vector<4x1xf32>
      %77 = vector.broadcast %64 : vector<4x1xf32> to vector<4x256xf32>
      %78 = arith.subf %60, %77 : vector<4x256xf32>
      %cst_43 = arith.constant 9.99999974E-6 : f32
      %79 = vector.broadcast %cst_43 : f32 to vector<4x1xf32>
      %80 = arith.addf %76, %79 : vector<4x1xf32>
      %81 = math.rsqrt %80 : vector<4x1xf32>
      %82 = vector.broadcast %81 : vector<4x1xf32> to vector<4x256xf32>
      %83 = arith.mulf %78, %82 : vector<4x256xf32>
      %84 = arith.negf %83 : vector<4x256xf32>
      %85 = math.exp %84 : vector<4x256xf32>
      %cst_44 = arith.constant 1.000000e+00 : f32
      %86 = vector.broadcast %cst_44 : f32 to vector<4x256xf32>
      %87 = arith.addf %86, %85 : vector<4x256xf32>
      %88 = arith.divf %86, %87 : vector<4x256xf32>
      %89 = arith.mulf %83, %88 : vector<4x256xf32>
      %c0_45 = arith.constant 0 : index
      %c0_46 = arith.constant 0 : index
      %c0_47 = arith.constant 0 : index
      %c0_48 = arith.constant 0 : index
      %90 = vector.load %arg8[%c0_45, %c0_46, %c0_47, %c0_48] : memref<1x1x4x256xf32, #tpu.memory_space<vmem>>, vector<1x1x4x256xf32>
      %91 = vector.shape_cast %90 : vector<1x1x4x256xf32> to vector<4x256xf32>
      %92 = vector.shape_cast %89 : vector<4x256xf32> to vector<1x1x4x256xf32>
      tpu.vector_store %arg8[%c0_45, %c0_46, %c0_47, %c0_48], %92 {strides = array<i32>} : memref<1x1x4x256xf32, #tpu.memory_space<vmem>>, vector<1x1x4x256xf32>,
    } else {
    }
    return
  }
  func.func @transform_0(%arg0: i32, %arg1: i32, %arg2: i32) -> i32 {
    %c0_i32 = arith.constant 0 : i32
    %c0_i32_0 = arith.constant 0 : i32
    return %c0_i32 : i32
  }
  func.func @transform_1(%arg0: i32, %arg1: i32, %arg2: i32) -> (i32, i32, i32, i32) {
    %c0_i32 = arith.constant 0 : i32
    %c0_i32_0 = arith.constant 0 : i32
    return %arg0, %arg1, %c0_i32, %arg2 : i32, i32, i32, i32
  }
  func.func @transform_2(%arg0: i32, %arg1: i32, %arg2: i32) -> (i32, i32) {
    %c0_i32 = arith.constant 0 : i32
    %c0_i32_0 = arith.constant 0 : i32
    return %c0_i32, %arg2 : i32, i32
  }
  func.func @transform_3(%arg0: i32, %arg1: i32, %arg2: i32) -> (i32, i32, i32) {
    %c0_i32 = arith.constant 0 : i32
    %c0_i32_0 = arith.constant 0 : i32
    return %arg0, %c0_i32, %arg2 : i32, i32, i32
  }
  func.func @transform_4(%arg0: i32, %arg1: i32, %arg2: i32) -> (i32, i32, i32, i32) {
    %c0_i32 = arith.constant 0 : i32
    %c0_i32_0 = arith.constant 0 : i32
    %c0_i32_1 = arith.constant 0 : i32
    %c0_i32_2 = arith.constant 0 : i32
    return %arg0, %c0_i32, %c0_i32_0, %c0_i32_1 : i32, i32, i32, i32
  }
  func.func @transform_5(%arg0: i32, %arg1: i32, %arg2: i32) -> (i32, i32, i32, i32) {
    %c0_i32 = arith.constant 0 : i32
    %c0_i32_0 = arith.constant 0 : i32
    %c0_i32_1 = arith.constant 0 : i32
    return %arg0, %arg1, %c0_i32, %c0_i32_0 : i32, i32, i32, i32
  }
}

</mosaic_0001>

<llo_original>
// kernel: _lambda_.1
$region0: #{_lambda_.1}
  #allocation0 [shape = 'u32[]', space=smem, size = 0x4, offset = 0x4, fixed_abs, tag = 'smem constant byte address 0x4 - core index']
  #allocation1 [shape = 'u32[144,128]{1,0:T(1,128)}', space=vmem, size = 0x12000, scoped, tag = 'internal scratch']
  %s0 = inlined_call_operand.vmem [shape: f32[4], index: 0, kind: input, shape index: {}]
  %s1 = inlined_call_operand.vmem [shape: bf16[2,2,18,256], index: 1, kind: input, shape index: {}]
  %s2 = inlined_call_operand.vmem [shape: bf16[18,256], index: 2, kind: input, shape index: {}]
  %s3 = inlined_call_operand.vmem [shape: f32[2,4,256], index: 3, kind: input, shape index: {}]
  %s4 = inlined_call_operand.vmem [shape: bf16[2,4,4,18], index: 4, kind: input, shape index: {}]
  %s5 = inlined_call_operand.vmem [shape: f32[2,2,4,256], index: 5, kind: output, shape index: {}]
  %s6 = sld [smem:[#allocation0]]
  $region61: #{_lambda_.1} parent=0
    _
  %s8 = ssub.s32 1, %s6
  %s9 = scalar_select 0, %s8, %s6
  $region1: #{_lambda_.1} parent=0
    #allocation2 [shape = 'u8[512]{0}', space=smem, size = 0x200, scoped, tag = 'input window, operand 0, single buffered']
    #allocation3 [shape = 's32[2]{0}', space=sflag, size = 0x8, scoped, tag = 'scoped memory for _lambda_.1']
    %10 = vsyncpa [#allocation3], 0
    loop: start=0, step=1, limit=6
    $region2: #{_lambda_.1} parent=1 // loop_pre_header
      _
    $region3: #{_lambda_.1} parent=1 // loop_header
      %s12 = sphi 0, %s16
      %p13 = scmp.ge.s32.totalorder %s12, 6
      %s19 = sphi 0, %s38
      %s20 = sphi 0, %s34
      %s21 = sphi 0, %s30
      %s22 = sphi 0, %s19
      %s23 = sphi 0, %s20
      %s24 = sphi 0, %s21
      %s25 = sphi 0, %s22
      %s26 = sphi 0, %s23
      %s27 = sphi 0, %s24
      %s39 = sphi 0, %s39
      %s41 = sphi 0, %s39
      %s42 = sphi 0, %s41
      %s56 = sphi 0, %s42
      %s66 = sphi 0, %s68
      %s69 = sphi 0, %s66
      %s70 = sphi 0, %s69
      %s86 = sphi 0, %s70
      %s92 = sphi 0, %s94
      %s95 = sphi 0, %s92
      %s96 = sphi 0, %s95
      %s112 = sphi 0, %s96
      %s120 = sphi 0, %s122
      %s123 = sphi 0, %s120
      %s124 = sphi 0, %s123
      %s140 = sphi 0, %s124
      %s146 = sphi 0, %s148
      %s149 = sphi 0, %s146
      %s150 = sphi 0, %s149
      %s166 = sphi 0, %s150
      %s174 = sphi 0, %s176
      %s177 = sphi 0, %s174
      %s178 = sphi 0, %s177
      %s194 = sphi 0, %s178
    $region4: #{_lambda_.1} parent=1 // loop_header_branch
      %15 = sbr.rel (%p13) target = $region8
    $region5: #{_lambda_.1} parent=1 // loop_body
      %s17 = ssub.s32 %s12, 1
      %s18 = ssub.s32 %s12, 2
      %s28 = sadd.s32 1, %s21
      %p29 = scmp.ge.s32.totalorder %s28, 1
      %s30 = scalar_select %p29, 0, %s28
      %s31 = sadd.s32 1, %s20
      %s32 = scalar_select %p29, %s31, %s20
      %p33 = scmp.ge.s32.totalorder %s32, 2
      %s34 = scalar_select %p33, 0, %s32
      %s35 = sadd.s32 1, %s19
      %s36 = scalar_select %p33, %s35, %s19
      %p37 = scmp.ge.s32.totalorder %s36, 2
      %s38 = scalar_select %p37, 0, %s36
      %s40 = sadd.s32 %s39, 1
      %p43 = scmp.eq.s32.totalorder %s12, 3
      %p44 = scmp.ne.s32.totalorder %s39, %s41
      %p45 = scmp.eq.s32.totalorder %s12, 0
      %p46 = por %p44, %p45
      %p47 = scmp.ne.s32.totalorder %s39, %s41
      %p48 = scmp.eq.s32.totalorder %s17, 3
      %p49 = por %p47, %p48
      %p50 = scmp.ne.s32.totalorder %s41, %s42
      %p51 = scmp.eq.s32.totalorder %s17, 0
      %p52 = por %p50, %p51
      %p53 = scmp.ne.s32.totalorder %s41, %s42
      %p54 = scmp.eq.s32.totalorder %s18, 3
      %p55 = por %p53, %p54
      %p57 = scmp.ne.s32.totalorder %s42, %s56
      %p58 = scmp.eq.s32.totalorder %s18, 0
      %p59 = por %p57, %p58
      %s60 = ssub.s32 %s19, %s38
      %s61 = ssub.s32 %s20, %s34
      %s62 = sor.u32 %s60, %s61
      %s63 = ssub.s32 %s21, %s30
      %s64 = sor.u32 %s62, %s63
      %p65 = scmp.eq.s32.totalorder %s64, 0
      %s67 = sadd.s32 %s66, 1
      %s68 = scalar_select %p65, %s66, %s67
      %p71 = pneg %p65
      %p72 = scmp.eq.s32.totalorder %s12, 3
      %p73 = por %p71, %p72
      %p74 = scmp.ne.s32.totalorder %s66, %s69
      %p75 = scmp.eq.s32.totalorder %s12, 0
      %p76 = por %p74, %p75
      %p77 = scmp.ne.s32.totalorder %s66, %s69
      %p78 = scmp.eq.s32.totalorder %s17, 3
      %p79 = por %p77, %p78
      %p80 = scmp.ne.s32.totalorder %s69, %s70
      %p81 = scmp.eq.s32.totalorder %s17, 0
      %p82 = por %p80, %p81
      %p83 = scmp.ne.s32.totalorder %s69, %s70
      %p84 = scmp.eq.s32.totalorder %s18, 3
      %p85 = por %p83, %p84
      %p87 = scmp.ne.s32.totalorder %s70, %s86
      %p88 = scmp.eq.s32.totalorder %s18, 0
      %p89 = por %p87, %p88
      %s90 = ssub.s32 %s21, %s30
      %p91 = scmp.eq.s32.totalorder %s90, 0
      %s93 = sadd.s32 %s92, 1
      %s94 = scalar_select %p91, %s92, %s93
      %p97 = pneg %p91
      %p98 = scmp.eq.s32.totalorder %s12, 3
      %p99 = por %p97, %p98
      %p100 = scmp.ne.s32.totalorder %s92, %s95
      %p101 = scmp.eq.s32.totalorder %s12, 0
      %p102 = por %p100, %p101
      %p103 = scmp.ne.s32.totalorder %s92, %s95
      %p104 = scmp.eq.s32.totalorder %s17, 3
      %p105 = por %p103, %p104
      %p106 = scmp.ne.s32.totalorder %s95, %s96
      %p107 = scmp.eq.s32.totalorder %s17, 0
      %p108 = por %p106, %p107
      %p109 = scmp.ne.s32.totalorder %s95, %s96
      %p110 = scmp.eq.s32.totalorder %s18, 3
      %p111 = por %p109, %p110
      %p113 = scmp.ne.s32.totalorder %s96, %s112
      %p114 = scmp.eq.s32.totalorder %s18, 0
      %p115 = por %p113, %p114
      %s116 = ssub.s32 %s19, %s38
      %s117 = ssub.s32 %s21, %s30
      %s118 = sor.u32 %s116, %s117
      %p119 = scmp.eq.s32.totalorder %s118, 0
      %s121 = sadd.s32 %s120, 1
      %s122 = scalar_select %p119, %s120, %s121
      %p125 = pneg %p119
      %p126 = scmp.eq.s32.totalorder %s12, 3
      %p127 = por %p125, %p126
      %p128 = scmp.ne.s32.totalorder %s120, %s123
      %p129 = scmp.eq.s32.totalorder %s12, 0
      %p130 = por %p128, %p129
      %p131 = scmp.ne.s32.totalorder %s120, %s123
      %p132 = scmp.eq.s32.totalorder %s17, 3
      %p133 = por %p131, %p132
      %p134 = scmp.ne.s32.totalorder %s123, %s124
      %p135 = scmp.eq.s32.totalorder %s17, 0
      %p136 = por %p134, %p135
      %p137 = scmp.ne.s32.totalorder %s123, %s124
      %p138 = scmp.eq.s32.totalorder %s18, 3
      %p139 = por %p137, %p138
      %p141 = scmp.ne.s32.totalorder %s124, %s140
      %p142 = scmp.eq.s32.totalorder %s18, 0
      %p143 = por %p141, %p142
      %s144 = ssub.s32 %s19, %s38
      %p145 = scmp.eq.s32.totalorder %s144, 0
      %s147 = sadd.s32 %s146, 1
      %s148 = scalar_select %p145, %s146, %s147
      %p151 = pneg %p145
      %p152 = scmp.eq.s32.totalorder %s12, 3
      %p153 = por %p151, %p152
      %p154 = scmp.ne.s32.totalorder %s146, %s149
      %p155 = scmp.eq.s32.totalorder %s12, 0
      %p156 = por %p154, %p155
      %p157 = scmp.ne.s32.totalorder %s146, %s149
      %p158 = scmp.eq.s32.totalorder %s17, 3
      %p159 = por %p157, %p158
      %p160 = scmp.ne.s32.totalorder %s149, %s150
      %p161 = scmp.eq.s32.totalorder %s17, 0
      %p162 = por %p160, %p161
      %p163 = scmp.ne.s32.totalorder %s149, %s150
      %p164 = scmp.eq.s32.totalorder %s18, 3
      %p165 = por %p163, %p164
      %p167 = scmp.ne.s32.totalorder %s150, %s166
      %p168 = scmp.eq.s32.totalorder %s18, 0
      %p169 = por %p167, %p168
      %s170 = ssub.s32 %s19, %s38
      %s171 = ssub.s32 %s20, %s34
      %s172 = sor.u32 %s170, %s171
      %p173 = scmp.eq.s32.totalorder %s172, 0
      %s175 = sadd.s32 %s174, 1
      %s176 = scalar_select %p173, %s174, %s175
      %p179 = pneg %p173
      %p180 = scmp.eq.s32.totalorder %s12, 3
      %p181 = por %p179, %p180
      %p182 = scmp.ne.s32.totalorder %s174, %s177
      %p183 = scmp.eq.s32.totalorder %s12, 0
      %p184 = por %p182, %p183
      %p185 = scmp.ne.s32.totalorder %s174, %s177
      %p186 = scmp.eq.s32.totalorder %s17, 3
      %p187 = por %p185, %p186
      %p188 = scmp.ne.s32.totalorder %s177, %s178
      %p189 = scmp.eq.s32.totalorder %s17, 0
      %p190 = por %p188, %p189
      %p191 = scmp.ne.s32.totalorder %s177, %s178
      %p192 = scmp.eq.s32.totalorder %s18, 3
      %p193 = por %p191, %p192
      %p195 = scmp.ne.s32.totalorder %s178, %s194
      %p196 = scmp.eq.s32.totalorder %s18, 0
      %p197 = por %p195, %p196
      %p198 = scmp.le.s32.totalorder 1, %s12
      %p199 = scmp.lt.s32.totalorder %s12, 5
      %p200 = pnand %p198, %p199
      %p201 = pneg %p200
      // Predicated region
      $region9: #{_lambda_.1} parent=5 // pred_check
        _
      $region10: #{_lambda_.1} parent=5 // pred_check_branch
        %203 = sbr.rel (%p200) target = $region12
      $region11: #{_lambda_.1} parent=5 // pred_region
        %s204 = ssub.s32 %s12, 1
        // Predicated region
        $region13: #{_lambda_.1} parent=11 // pred_check
          %p205 = pneg %p52
        $region14: #{_lambda_.1} parent=11 // pred_check_branch
          %207 = sbr.rel (%p205) target = $region16
        $region15: #{_lambda_.1} parent=11 // pred_region
          %s209 = ssub.s32 16, 16
          %210 = vsyncadd [#allocation3], %s209
          %s212 = sshll.u32 %s0, 4
          %s213 = int_to_ptr.vmem [resolvable:$true] %s212
          %215 = dma.vmem_to_smem %s213, 16, [#allocation2], [#allocation3]
        $region16: #{_lambda_.1} parent=11 // pred_fallthru
          _
        // Predicated region
        $region17: #{_lambda_.1} parent=11 // pred_check
          %p216 = pneg %p108
        $region18: #{_lambda_.1} parent=11 // pred_check_branch
          %218 = sbr.rel (%p216) target = $region20
        $region19: #{_lambda_.1} parent=11 // pred_region
          %s219 = smul.u32 2, %s24
          %p220 = scmp.lt.s32.totalorder %s219, 1
          %s221 = scalar_select %p220, %s219, 1
          %s222 = smul.addr %s221, 4
          %s223 = scalar_lea.vmem %s2, %s222
          %s224 = smul.u32 2, %s24
        $region20: #{_lambda_.1} parent=11 // pred_fallthru
          _
      $region12: #{_lambda_.1} parent=5 // pred_fallthru
        _
      %p225 = scmp.lt.s32.totalorder %s12, 4
      // Predicated region
      $region21: #{_lambda_.1} parent=5 // pred_check
        %p226 = pneg %p225
      $region22: #{_lambda_.1} parent=5 // pred_check_branch
        %228 = sbr.rel (%p226) target = $region24
      $region23: #{_lambda_.1} parent=5 // pred_region
        // Predicated region
        $region25: #{_lambda_.1} parent=23 // pred_check
          %p229 = pneg %p76
        $region26: #{_lambda_.1} parent=23 // pred_check_branch
          %231 = sbr.rel (%p229) target = $region28
        $region27: #{_lambda_.1} parent=23 // pred_region
          %s232 = smul.u32 2, %s21
          %p233 = scmp.lt.s32.totalorder %s19, 1
          %s234 = scalar_select %p233, %s19, 1
          %p235 = scmp.lt.s32.totalorder %s20, 1
          %s236 = scalar_select %p235, %s20, 1
          %p237 = scmp.lt.s32.totalorder %s232, 1
          %s238 = scalar_select %p237, %s232, 1
          %s239 = smul.addr %s236, 6
          %s240 = sadd.s32 %s238, %s239
          %s241 = smul.addr %s234, 12
          %s242 = sadd.s32 %s240, %s241
          %s243 = smul.addr %s242, 4
          %s244 = scalar_lea.vmem %s1, %s243
          %s245 = smul.u32 2, %s21
        $region28: #{_lambda_.1} parent=23 // pred_fallthru
          _
        // Predicated region
        $region29: #{_lambda_.1} parent=23 // pred_check
          %p246 = pneg %p130
        $region30: #{_lambda_.1} parent=23 // pred_check_branch
          %248 = sbr.rel (%p246) target = $region32
        $region31: #{_lambda_.1} parent=23 // pred_region
          %s249 = smul.u32 2, %s21
          %p250 = scmp.lt.s32.totalorder %s19, 1
          %s251 = scalar_select %p250, %s19, 1
          %p252 = scmp.lt.s32.totalorder %s249, 1
          %s253 = scalar_select %p252, %s249, 1
          %s254 = smul.addr %s251, 2
          %s255 = sadd.s32 %s253, %s254
          %s256 = smul.addr %s255, 4
          %s257 = scalar_lea.vmem %s3, %s256
          %s258 = smul.u32 2, %s21
        $region32: #{_lambda_.1} parent=23 // pred_fallthru
          _
        // Predicated region
        $region33: #{_lambda_.1} parent=23 // pred_check
          %p259 = pneg %p156
        $region34: #{_lambda_.1} parent=23 // pred_check_branch
          %261 = sbr.rel (%p259) target = $region36
        $region35: #{_lambda_.1} parent=23 // pred_region
          %p262 = scmp.lt.s32.totalorder %s19, 1
          %s263 = scalar_select %p262, %s19, 1
          %s264 = smul.addr %s263, 4
          %s265 = smul.addr %s264, 2
          %s266 = scalar_lea.vmem %s4, %s265
        $region36: #{_lambda_.1} parent=23 // pred_fallthru
          _
      $region24: #{_lambda_.1} parent=5 // pred_fallthru
        _
      %p267 = scmp.le.s32.totalorder 1, %s12
      %p268 = scmp.lt.s32.totalorder %s12, 5
      %p269 = pnand %p267, %p268
      %p270 = pneg %p269
      // Predicated region
      $region37: #{_lambda_.1} parent=5 // pred_check
        _
      $region38: #{_lambda_.1} parent=5 // pred_check_branch
        %272 = sbr.rel (%p269) target = $region40
      $region39: #{_lambda_.1} parent=5 // pred_region
        %s273 = ssub.s32 %s12, 1
        // Predicated region
        $region41: #{_lambda_.1} parent=39 // pred_check
          %p274 = pneg %p52
        $region42: #{_lambda_.1} parent=39 // pred_check_branch
          %276 = sbr.rel (%p274) target = $region44
        $region43: #{_lambda_.1} parent=39 // pred_region
          %277 = dma.done [#allocation3], 16
        $region44: #{_lambda_.1} parent=39 // pred_fallthru
          _
        %278 = sfence
        %p279 = pneg %p52
        %p280 = pneg %p49
        %s281 = smul.u32 2, %s24
        %p282 = scmp.lt.s32.totalorder %s22, 1
        %s283 = scalar_select %p282, %s22, 1
        %p284 = scmp.lt.s32.totalorder %s23, 1
        %s285 = scalar_select %p284, %s23, 1
        %p286 = scmp.lt.s32.totalorder %s281, 1
        %s287 = scalar_select %p286, %s281, 1
        %s288 = smul.addr %s285, 6
        %s289 = sadd.s32 %s287, %s288
        %s290 = smul.addr %s283, 12
        %s291 = sadd.s32 %s289, %s290
        %s292 = smul.addr %s291, 4
        %s293 = scalar_lea.vmem %s1, %s292
        %p294 = pneg %p82
        %p295 = pneg %p79
        %s296 = smul.u32 2, %s24
        %p297 = scmp.lt.s32.totalorder %s296, 1
        %s298 = scalar_select %p297, %s296, 1
        %s299 = smul.addr %s298, 4
        %s300 = scalar_lea.vmem %s2, %s299
        %p301 = pneg %p108
        %p302 = pneg %p105
        %s303 = smul.u32 2, %s24
        %p304 = scmp.lt.s32.totalorder %s22, 1
        %s305 = scalar_select %p304, %s22, 1
        %p306 = scmp.lt.s32.totalorder %s303, 1
        %s307 = scalar_select %p306, %s303, 1
        %s308 = smul.addr %s305, 2
        %s309 = sadd.s32 %s307, %s308
        %s310 = smul.addr %s309, 4
        %s311 = scalar_lea.vmem %s3, %s310
        %p312 = pneg %p136
        %p313 = pneg %p133
        %p314 = scmp.lt.s32.totalorder %s22, 1
        %s315 = scalar_select %p314, %s22, 1
        %s316 = smul.addr %s315, 4
        %s317 = smul.addr %s316, 2
        %s318 = scalar_lea.vmem %s4, %s317
        %p319 = pneg %p162
        %p320 = pneg %p159
        %p321 = pneg %p190
        %p322 = pneg %p187
        %p323 = scmp.lt.s32.totalorder %s22, 1
        %s324 = scalar_select %p323, %s22, 1
        %p325 = scmp.lt.s32.totalorder %s23, 1
        %s326 = scalar_select %p325, %s23, 1
        %s327 = smul.addr %s326, 2
        %s328 = smul.addr %s324, 4
        %s329 = sadd.s32 %s327, %s328
        %s330 = smul.addr %s329, 4
        %s331 = scalar_lea.vmem %s5, %s330
        %s332 = smul.u32 2, %s24
        %p333 = scmp.lt.s32.totalorder %s22, 1
        %s334 = scalar_select %p333, %s22, 1
        %p335 = scmp.lt.s32.totalorder %s23, 1
        %s336 = scalar_select %p335, %s23, 1
        %p337 = scmp.lt.s32.totalorder %s332, 1
        %s338 = scalar_select %p337, %s332, 1
        %s339 = smul.addr %s336, 6
        %s340 = sadd.s32 %s338, %s339
        %s341 = smul.addr %s334, 12
        %s342 = sadd.s32 %s340, %s341
        %s343 = smul.addr %s342, 4
        %s344 = scalar_lea.vmem %s1, %s343
        %s345 = smul.u32 2, %s24
        %s346 = smul.u32 2, %s24
        %p347 = scmp.lt.s32.totalorder %s346, 1
        %s348 = scalar_select %p347, %s346, 1
        %s349 = smul.addr %s348, 4
        %s350 = scalar_lea.vmem %s2, %s349
        %s351 = smul.u32 2, %s24
        %s352 = smul.u32 2, %s24
        %p353 = scmp.lt.s32.totalorder %s22, 1
        %s354 = scalar_select %p353, %s22, 1
        %p355 = scmp.lt.s32.totalorder %s352, 1
        %s356 = scalar_select %p355, %s352, 1
        %s357 = smul.addr %s354, 2
        %s358 = sadd.s32 %s356, %s357
        %s359 = smul.addr %s358, 4
        %s360 = scalar_lea.vmem %s3, %s359
        %s361 = smul.u32 2, %s24
        %p362 = scmp.lt.s32.totalorder %s22, 1
        %s363 = scalar_select %p362, %s22, 1
        %s364 = smul.addr %s363, 4
        %s365 = smul.addr %s364, 2
        %s366 = scalar_lea.vmem %s4, %s365
        %p367 = scmp.lt.s32.totalorder %s22, 1
        %s368 = scalar_select %p367, %s22, 1
        %p369 = scmp.lt.s32.totalorder %s23, 1
        %s370 = scalar_select %p369, %s23, 1
        %s371 = smul.addr %s370, 2
        %s372 = smul.addr %s368, 4
        %s373 = sadd.s32 %s371, %s372
        %s374 = smul.addr %s373, 4
        %s375 = scalar_lea.vmem %s5, %s374
        %s377 = smul.u32 %s22, 2
        %s378 = sld [smem:[#allocation2 + %s377]]
        %s379 = sadd.s32 %s377, 1
        %s380 = sld [smem:[#allocation2 + %s379]]
        %v381 = vld [vmem:[%s344] sm:$0xff]
        %v382 = vld [vmem:[%s344 + $0x8] sm:$0xff]
        %v383 = vld [vmem:[%s344 + $0x10] sm:$0x11]
        %v384 = vld [vmem:[%s350] sm:$0xff]
        %v385 = vld [vmem:[%s350 + $0x8] sm:$0xff]
        %v386 = vld [vmem:[%s350 + $0x10] sm:$0x11]
        %v387 = vunpack.c.l.bf16 %v384
        %v388 = vunpack.c.h.bf16 %v384
        %v389 = vunpack.c.l.bf16 %v385
        %v390 = vunpack.c.h.bf16 %v385
        %v391 = vunpack.c.l.bf16 %v386
        %v392 = vunpack.c.h.bf16 %v386
        %v393 = vunpack.c.l.bf16 %v381
        %v394 = vunpack.c.h.bf16 %v381
        %v395 = vunpack.c.l.bf16 %v382
        %v396 = vunpack.c.h.bf16 %v382
        %v397 = vunpack.c.l.bf16 %v383
        %v398 = vunpack.c.h.bf16 %v383
        %v399 = vstv %s378
        %v400 = vmul.f32 %v399, %v393
        %v401 = vmul.f32 %v399, %v394
        %v402 = vmul.f32 %v399, %v395
        %v403 = vmul.f32 %v399, %v396
        %v404 = vmul.f32 %v399, %v397
        %v405 = vmul.f32 %v399, %v398
        %v406 = vstv %s380
        %v407 = vadd.f32 %v400, %v406
        %v408 = vadd.f32 %v401, %v406
        %v409 = vadd.f32 %v402, %v406
        %v410 = vadd.f32 %v403, %v406
        %v411 = vadd.f32 %v404, %v406
        %v412 = vadd.f32 %v405, %v406
        %v413 = vld [vmem:[%s360] sm:$0xff]
        %v414 = vld [vmem:[%s366] sm:$0x3]
        %v418 = vunpack.c.l.b16 %v381
        %v419 = vunpack.c.h.b16 %v381
        %v420 = vunpack.c.l.b16 %v382
        %v421 = vunpack.c.h.b16 %v382
        %v422 = vunpack.c.l.b16 %v383
        %v423 = vunpack.c.h.b16 %v383
        %v424 = vpack.c.b16 %v420, %v418
        %v425 = vpack.c.b16 %v421, %v419
        %v426 = vpack.c.b16 %v422, %v422
        %v427 = vpack.c.b16 %v423, %v423
        %vm430 = vcmask 146432
        %v432 = vsel %vm430, %v414, 0
        %vm434 = vcmask 1040384
        %v436 = vsel %vm434, %v426, 0
        %v439 = vsel %vm434, %v427, 0
        %441 = vmatprep.subr.bf16.mxu0 %v425
        %442 = vmatpush1.bf16.msra.mxu0 %v424
        %443 = vmatprep.subr.bf16.mxu0 %v439
        %444 = vmatpush1.bf16.msra.mxu0 %v436
        %445 = vmatprep.subr.bf16.mxu0 0
        %446 = vmatpush1.bf16.msra.mxu0 0
        %447 = vmatprep.subr.bf16.mxu0 0
        %448 = vmatpush1.bf16.msra.mxu0 0
        %449 = vmatprep.subr.bf16.mxu0 0
        %450 = vmatpush1.bf16.msra.mxu0 0
        %451 = vmatprep.subr.bf16.mxu0 0
        %452 = vmatpush1.bf16.msra.mxu0 0
        %453 = vmatprep.subr.bf16.mxu0 0
        %454 = vmatpush1.bf16.msra.mxu0 0
        %455 = vmatprep.subr.bf16.mxu0 0
        %456 = vmatpush1.bf16.msra.mxu0 0
        %457 = vmatprep.subr.bf16.mxu0 0
        %458 = vmatpush1.bf16.msra.mxu0 0
        %459 = vmatprep.subr.bf16.mxu0 0
        %460 = vmatpush1.bf16.msra.mxu0 0
        %461 = vmatprep.subr.bf16.mxu0 0
        %462 = vmatpush1.bf16.msra.mxu0 0
        %463 = vmatprep.subr.bf16.mxu0 0
        %464 = vmatpush1.bf16.msra.mxu0 0
        %465 = vmatprep.subr.bf16.mxu0 0
        %466 = vmatpush1.bf16.msra.mxu0 0
        %467 = vmatprep.subr.bf16.mxu0 0
        %468 = vmatpush1.bf16.msra.mxu0 0
        %469 = vmatprep.subr.bf16.mxu0 0
        %470 = vmatpush1.bf16.msra.mxu0 0
        %471 = vmatprep.subr.bf16.mxu0 0
        %472 = vmatpush1.bf16.msra.mxu0 0
        %473 = vmatprep.mubr.bf16.mxu0 0
        %474 = vmatmul.mubr.bf16.gmra.mrb[0].mxu0 %v432
        %v475 = vpop.f32.mrb[0].mxu0
        %v476 = vadd.f32 0.0, %v475
        %v477 = vpop.f32.mrb[0].mxu0
        %v478 = vadd.f32 0.0, %v477
        %v479 = vpop.f32.mrb[0].mxu0
        %v480 = vpop.f32.mrb[0].mxu0
        %481 = vdwg.mxu0
        %v484 = vcombine.low %v476, %v478
        %v486 = vadd.f32 %v413, %v484
        %v487 = vmul.f32 %v407, %v387
        %v488 = vmul.f32 %v408, %v388
        %v489 = vmul.f32 %v409, %v389
        %v490 = vmul.f32 %v410, %v390
        %v491 = vmul.f32 %v411, %v391
        %v492 = vmul.f32 %v412, %v392
        %s493 = scalar_lea.vmem %s366, 2
        %v494 = vld [vmem:[%s493] sm:$0x3]
        %v495 = vpack.c.bf16 %v489, %v487
        %v496 = vpack.c.bf16 %v490, %v488
        %v497 = vpack.c.bf16 %v491, %v491
        %v498 = vpack.c.bf16 %v492, %v492
        %v500 = vsel %vm430, %v494, 0
        %v503 = vsel %vm434, %v497, 0
        %v506 = vsel %vm434, %v498, 0
        %508 = vmatprep.subr.bf16.mxu0 %v496
        %509 = vmatpush1.bf16.msra.mxu0 %v495
        %510 = vmatprep.subr.bf16.mxu0 %v506
        %511 = vmatpush1.bf16.msra.mxu0 %v503
        %512 = vmatprep.subr.bf16.mxu0 0
        %513 = vmatpush1.bf16.msra.mxu0 0
        %514 = vmatprep.subr.bf16.mxu0 0
        %515 = vmatpush1.bf16.msra.mxu0 0
        %516 = vmatprep.subr.bf16.mxu0 0
        %517 = vmatpush1.bf16.msra.mxu0 0
        %518 = vmatprep.subr.bf16.mxu0 0
        %519 = vmatpush1.bf16.msra.mxu0 0
        %520 = vmatprep.subr.bf16.mxu0 0
        %521 = vmatpush1.bf16.msra.mxu0 0
        %522 = vmatprep.subr.bf16.mxu0 0
        %523 = vmatpush1.bf16.msra.mxu0 0
        %524 = vmatprep.subr.bf16.mxu0 0
        %525 = vmatpush1.bf16.msra.mxu0 0
        %526 = vmatprep.subr.bf16.mxu0 0
        %527 = vmatpush1.bf16.msra.mxu0 0
        %528 = vmatprep.subr.bf16.mxu0 0
        %529 = vmatpush1.bf16.msra.mxu0 0
        %530 = vmatprep.subr.bf16.mxu0 0
        %531 = vmatpush1.bf16.msra.mxu0 0
        %532 = vmatprep.subr.bf16.mxu0 0
        %533 = vmatpush1.bf16.msra.mxu0 0
        %534 = vmatprep.subr.bf16.mxu0 0
        %535 = vmatpush1.bf16.msra.mxu0 0
        %536 = vmatprep.subr.bf16.mxu0 0
        %537 = vmatpush1.bf16.msra.mxu0 0
        %538 = vmatprep.subr.bf16.mxu0 0
        %539 = vmatpush1.bf16.msra.mxu0 0
        %540 = vmatprep.mubr.bf16.mxu0 0
        %541 = vmatmul.mubr.bf16.gmra.mrb[0].mxu0 %v500
        %v542 = vpop.f32.mrb[0].mxu0
        %v543 = vadd.f32 0.0, %v542
        %v544 = vpop.f32.mrb[0].mxu0
        %v545 = vadd.f32 0.0, %v544
        %v546 = vpop.f32.mrb[0].mxu0
        %v547 = vpop.f32.mrb[0].mxu0
        %548 = vdwg.mxu0
        %v551 = vcombine.low %v543, %v545
        %v553 = vadd.f32 %v486, %v551
        %v554 = vmul.f32 %v407, %v487
        %v555 = vmul.f32 %v408, %v488
        %v556 = vmul.f32 %v409, %v489
        %v557 = vmul.f32 %v410, %v490
        %v558 = vmul.f32 %v411, %v491
        %v559 = vmul.f32 %v412, %v492
        %v560 = vmul.f32 %v554, 1.5
        %v561 = vmul.f32 %v555, 1.5
        %v562 = vmul.f32 %v556, 1.5
        %v563 = vmul.f32 %v557, 1.5
        %v564 = vmul.f32 %v558, 1.5
        %v565 = vmul.f32 %v559, 1.5
        %v566 = vmul.f32 %v387, 0.5
        %v567 = vmul.f32 %v388, 0.5
        %v568 = vmul.f32 %v389, 0.5
        %v569 = vmul.f32 %v390, 0.5
        %v570 = vmul.f32 %v391, 0.5
        %v571 = vmul.f32 %v392, 0.5
        %v572 = vsub.f32 %v560, %v566
        %v573 = vsub.f32 %v561, %v567
        %v574 = vsub.f32 %v562, %v568
        %v575 = vsub.f32 %v563, %v569
        %v576 = vsub.f32 %v564, %v570
        %v577 = vsub.f32 %v565, %v571
        %s578 = scalar_lea.vmem %s366, 4
        %v579 = vld [vmem:[%s578] sm:$0x3]
        %v580 = vpack.c.bf16 %v574, %v572
        %v581 = vpack.c.bf16 %v575, %v573
        %v582 = vpack.c.bf16 %v576, %v576
        %v583 = vpack.c.bf16 %v577, %v577
        %v585 = vsel %vm430, %v579, 0
        %v588 = vsel %vm434, %v582, 0
        %v591 = vsel %vm434, %v583, 0
        %593 = vmatprep.subr.bf16.mxu0 %v581
        %594 = vmatpush1.bf16.msra.mxu0 %v580
        %595 = vmatprep.subr.bf16.mxu0 %v591
        %596 = vmatpush1.bf16.msra.mxu0 %v588
        %597 = vmatprep.subr.bf16.mxu0 0
        %598 = vmatpush1.bf16.msra.mxu0 0
        %599 = vmatprep.subr.bf16.mxu0 0
        %600 = vmatpush1.bf16.msra.mxu0 0
        %601 = vmatprep.subr.bf16.mxu0 0
        %602 = vmatpush1.bf16.msra.mxu0 0
        %603 = vmatprep.subr.bf16.mxu0 0
        %604 = vmatpush1.bf16.msra.mxu0 0
        %605 = vmatprep.subr.bf16.mxu0 0
        %606 = vmatpush1.bf16.msra.mxu0 0
        %607 = vmatprep.subr.bf16.mxu0 0
        %608 = vmatpush1.bf16.msra.mxu0 0
        %609 = vmatprep.subr.bf16.mxu0 0
        %610 = vmatpush1.bf16.msra.mxu0 0
        %611 = vmatprep.subr.bf16.mxu0 0
        %612 = vmatpush1.bf16.msra.mxu0 0
        %613 = vmatprep.subr.bf16.mxu0 0
        %614 = vmatpush1.bf16.msra.mxu0 0
        %615 = vmatprep.subr.bf16.mxu0 0
        %616 = vmatpush1.bf16.msra.mxu0 0
        %617 = vmatprep.subr.bf16.mxu0 0
        %618 = vmatpush1.bf16.msra.mxu0 0
        %619 = vmatprep.subr.bf16.mxu0 0
        %620 = vmatpush1.bf16.msra.mxu0 0
        %621 = vmatprep.subr.bf16.mxu0 0
        %622 = vmatpush1.bf16.msra.mxu0 0
        %623 = vmatprep.subr.bf16.mxu0 0
        %624 = vmatpush1.bf16.msra.mxu0 0
        %625 = vmatprep.mubr.bf16.mxu0 0
        %626 = vmatmul.mubr.bf16.gmra.mrb[0].mxu0 %v585
        %v627 = vpop.f32.mrb[0].mxu0
        %v628 = vadd.f32 0.0, %v627
        %v629 = vpop.f32.mrb[0].mxu0
        %v630 = vadd.f32 0.0, %v629
        %v631 = vpop.f32.mrb[0].mxu0
        %v632 = vpop.f32.mrb[0].mxu0
        %633 = vdwg.mxu0
        %v636 = vcombine.low %v628, %v630
        %v638 = vadd.f32 %v553, %v636
        %v639 = vmul.f32 %v407, %v572
        %v640 = vmul.f32 %v408, %v573
        %v641 = vmul.f32 %v409, %v574
        %v642 = vmul.f32 %v410, %v575
        %v643 = vmul.f32 %v411, %v576
        %v644 = vmul.f32 %v412, %v577
        %v645 = vmul.f32 %v639, 1.6666666
        %v646 = vmul.f32 %v640, 1.6666666
        %v647 = vmul.f32 %v641, 1.6666666
        %v648 = vmul.f32 %v642, 1.6666666
        %v649 = vmul.f32 %v643, 1.6666666
        %v650 = vmul.f32 %v644, 1.6666666
        %v651 = vmul.f32 %v487, 0.6666667
        %v652 = vmul.f32 %v488, 0.6666667
        %v653 = vmul.f32 %v489, 0.6666667
        %v654 = vmul.f32 %v490, 0.6666667
        %v655 = vmul.f32 %v491, 0.6666667
        %v656 = vmul.f32 %v492, 0.6666667
        %v657 = vsub.f32 %v645, %v651
        %v658 = vsub.f32 %v646, %v652
        %v659 = vsub.f32 %v647, %v653
        %v660 = vsub.f32 %v648, %v654
        %v661 = vsub.f32 %v649, %v655
        %v662 = vsub.f32 %v650, %v656
        %s663 = scalar_lea.vmem %s366, 6
        %v664 = vld [vmem:[%s663] sm:$0x3]
        %v665 = vpack.c.bf16 %v659, %v657
        %v666 = vpack.c.bf16 %v660, %v658
        %v667 = vpack.c.bf16 %v661, %v661
        %v668 = vpack.c.bf16 %v662, %v662
        %v670 = vsel %vm430, %v664, 0
        %v673 = vsel %vm434, %v667, 0
        %v676 = vsel %vm434, %v668, 0
        %678 = vmatprep.subr.bf16.mxu0 %v666
        %679 = vmatpush1.bf16.msra.mxu0 %v665
        %680 = vmatprep.subr.bf16.mxu0 %v676
        %681 = vmatpush1.bf16.msra.mxu0 %v673
        %682 = vmatprep.subr.bf16.mxu0 0
        %683 = vmatpush1.bf16.msra.mxu0 0
        %684 = vmatprep.subr.bf16.mxu0 0
        %685 = vmatpush1.bf16.msra.mxu0 0
        %686 = vmatprep.subr.bf16.mxu0 0
        %687 = vmatpush1.bf16.msra.mxu0 0
        %688 = vmatprep.subr.bf16.mxu0 0
        %689 = vmatpush1.bf16.msra.mxu0 0
        %690 = vmatprep.subr.bf16.mxu0 0
        %691 = vmatpush1.bf16.msra.mxu0 0
        %692 = vmatprep.subr.bf16.mxu0 0
        %693 = vmatpush1.bf16.msra.mxu0 0
        %694 = vmatprep.subr.bf16.mxu0 0
        %695 = vmatpush1.bf16.msra.mxu0 0
        %696 = vmatprep.subr.bf16.mxu0 0
        %697 = vmatpush1.bf16.msra.mxu0 0
        %698 = vmatprep.subr.bf16.mxu0 0
        %699 = vmatpush1.bf16.msra.mxu0 0
        %700 = vmatprep.subr.bf16.mxu0 0
        %701 = vmatpush1.bf16.msra.mxu0 0
        %702 = vmatprep.subr.bf16.mxu0 0
        %703 = vmatpush1.bf16.msra.mxu0 0
        %704 = vmatprep.subr.bf16.mxu0 0
        %705 = vmatpush1.bf16.msra.mxu0 0
        %706 = vmatprep.subr.bf16.mxu0 0
        %707 = vmatpush1.bf16.msra.mxu0 0
        %708 = vmatprep.subr.bf16.mxu0 0
        %709 = vmatpush1.bf16.msra.mxu0 0
        %710 = vmatprep.mubr.bf16.mxu0 0
        %711 = vmatmul.mubr.bf16.gmra.mrb[0].mxu0 %v670
        %v712 = vpop.f32.mrb[0].mxu0
        %v713 = vadd.f32 0.0, %v712
        %v714 = vpop.f32.mrb[0].mxu0
        %v715 = vadd.f32 0.0, %v714
        %v716 = vpop.f32.mrb[0].mxu0
        %v717 = vpop.f32.mrb[0].mxu0
        %718 = vdwg.mxu0
        %v721 = vcombine.low %v713, %v715
        %v723 = vadd.f32 %v638, %v721
        %s724 = smul.u32 %s24, 256
        %s725 = sshra.s32 %s724, 7
        %s726 = sand.u32 %s724, 127
        %s727 = smul.addr %s725, 4
        %s728 = scalar_lea.vmem %s375, %s727
        %729 = vst [vmem:[%s728] sm:$0xff] %v723
        %p730 = scmp.eq.s32.totalorder %s24, 0
        // Predicated region
        $region45: #{_lambda_.1} parent=39 // pred_check
          %p731 = pneg %p730
        $region46: #{_lambda_.1} parent=39 // pred_check_branch
          %733 = sbr.rel (%p731) target = $region48
        $region47: #{_lambda_.1} parent=39 // pred_region
          %v734 = vld [vmem:[%s375] sm:$0xff]
          %v736 = vcombine.high %v734, %v734
          %vm738 = vcmask 1043456
          %v739 = vsel %vm738, %v734, 0.0
          %v740 = vsel %vm738, %v736, 0.0
          %v741 = vadd.f32 %v739, %v740
          %742 = vadd.xlane.f32.xlu0 %v741
          %v743 = vpop.xlane.xlu0 %742
          %v744 = vmul.f32 %v743, 0.00390625
          %v745 = vlaneseq
          %v746 = vand.u32 %v745, 127
          %v747 = vadd.s32 %v746, 128
          %vm748 = vcmp.lt.s32.totalorder %v746, 256
          %vm749 = vcmp.lt.s32.totalorder %v747, 256
          %v752 = vunpack.c.l.s4 839922192
          %v753 = vunpack.c.0.s8 %v752
          %v754 = vlaneseq
          %v755 = vshrl.u32 %v754, 7
          %v756 = vsub.s32 %v753, %v755
          %v757 = vrot.slane %v744, %v756
          %v759 = vsub.f32 %v734, %v757
          %v761 = vcombine.high %v759, %v759
          %v763 = vsel %vm748, %v759, 0.0
          %v764 = vsel %vm749, %v761, 0.0
          %v765 = vmul.f32 %v763, %v763
          %v766 = vmul.f32 %v764, %v764
          %v767 = vsel %vm738, %v765, 0.0
          %v768 = vsel %vm738, %v766, 0.0
          %v769 = vadd.f32 %v767, %v768
          %770 = vadd.xlane.f32.xlu0 %v769
          %v771 = vpop.xlane.xlu0 %770
          %v772 = vmul.f32 %v771, 0.00390625
          %v773 = vadd.f32 %v772, 1e-05
          %v774 = vrsqrt.pop %v773
          %v777 = vunpack.c.l.s4 839922192
          %v778 = vunpack.c.0.s8 %v777
          %v779 = vlaneseq
          %v780 = vshrl.u32 %v779, 7
          %v781 = vsub.s32 %v778, %v780
          %v782 = vrot.slane %v774, %v781
          %v784 = vmul.f32 %v759, %v782
          %v785 = vxor.u32 %v784, 2147483648
          %v786 = vmul.f32 %v785, 1.442695
          %v787 = vpow.pop %v786
          %v788 = vadd.f32 %v787, 1.0
          %v789 = vrcp.pop %v788
          %v790 = vmul.f32 1.0, %v789
          %v791 = vmul.f32 %v784, %v790
          %792 = vst [vmem:[%s375] sm:$0xff] %v791
        $region48: #{_lambda_.1} parent=39 // pred_fallthru
          _
        %p793 = scmp.lt.s32.totalorder %s22, 1
        %s794 = scalar_select %p793, %s22, 1
        %p795 = scmp.lt.s32.totalorder %s23, 1
        %s796 = scalar_select %p795, %s23, 1
        %s797 = smul.addr %s796, 2
        %s798 = smul.addr %s794, 4
        %s799 = sadd.s32 %s797, %s798
        %s800 = smul.addr %s799, 4
        %s801 = scalar_lea.vmem %s5, %s800
        // Predicated region
        $region49: #{_lambda_.1} parent=39 // pred_check
          %p802 = pneg %p187
        $region50: #{_lambda_.1} parent=39 // pred_check_branch
          %804 = sbr.rel (%p802) target = $region52
        $region51: #{_lambda_.1} parent=39 // pred_region
          _
        $region52: #{_lambda_.1} parent=39 // pred_fallthru
          _
      $region40: #{_lambda_.1} parent=5 // pred_fallthru
        _
      %p805 = scmp.le.s32.totalorder 2, %s12
      // Predicated region
      $region53: #{_lambda_.1} parent=5 // pred_check
        %p806 = pneg %p805
      $region54: #{_lambda_.1} parent=5 // pred_check_branch
        %808 = sbr.rel (%p806) target = $region56
      $region55: #{_lambda_.1} parent=5 // pred_region
        %s809 = ssub.s32 %s12, 2
        // Predicated region
        $region57: #{_lambda_.1} parent=55 // pred_check
          %p810 = pneg %p193
        $region58: #{_lambda_.1} parent=55 // pred_check_branch
          %812 = sbr.rel (%p810) target = $region60
        $region59: #{_lambda_.1} parent=55 // pred_region
          %p813 = scmp.lt.s32.totalorder %s25, 1
          %s814 = scalar_select %p813, %s25, 1
          %p815 = scmp.lt.s32.totalorder %s26, 1
          %s816 = scalar_select %p815, %s26, 1
          %s817 = smul.addr %s816, 2
          %s818 = smul.addr %s814, 4
          %s819 = sadd.s32 %s817, %s818
          %s820 = smul.addr %s819, 4
          %s821 = scalar_lea.vmem %s5, %s820
        $region60: #{_lambda_.1} parent=55 // pred_fallthru
          _
      $region56: #{_lambda_.1} parent=5 // pred_fallthru
        _
    $region6: #{_lambda_.1} parent=1 // loop_footer
      %s16 = sadd.s32 1, %s12
    $region7: #{_lambda_.1} parent=1 // loop_footer_branch
      %11 = sbr.rel target = $region3
    $region8: #{_lambda_.1} parent=1 // loop_exit
      _
    %822 = vsyncpa [#allocation3], 1
    %s823 = scalar_lea.sflag [#allocation3], 1
    %824 = vsyncpa %s823, 1

</llo_original>
